<compile_context>
chip_gen: v5e
topology: v5e:2x2
jax: 0.10.0
libtpu: 0.0.40
codegen_flags: <defaults>
</compile_context>

<pallas_src>
import jax
import jax.numpy as jnp
from jax import lax
from jax.experimental import pallas as pl
from jax.experimental.pallas import tpu as pltpu

_LANES = 128
_SUBLANES = 8
_GROUP_MAX = 256          # rows per inner-loop group (multiple of 32)


def _round_up(x, m):
    return (x + m - 1) // m * m


def _sublane_pack(*dtypes):
    """Minimum sublane multiple for the narrowest participating dtype."""
    pack = _SUBLANES
    for dt in dtypes:
        isz = max(1, jnp.dtype(dt).itemsize)
        pack = max(pack, _SUBLANES * max(1, 4 // isz))   # f32->8, bf16->16, i8->32
    return pack


def _device_defaults():
    """(tile_rows, num_chunks) tuned per TPU generation."""
    kind = ""
    try:
        kind = jax.devices()[0].device_kind.lower()
    except Exception:
        pass
    if "v5 lite" in kind or "v5e" in kind or "v5lite" in kind:
        return 4096, 1      # stay under v5e's 16 MiB scoped-VMEM default
    if "v7" in kind or "7x" in kind:
        return 16384, 2     # 2 TensorCores; 64 MiB physical VMEM (explicit limit set)
    return 8192, 1          # v6e / v5p / fallback (fits 32 MiB scoped default)


def _build_kernel(*, steps, tr, group, rows_valid, grid_rows,
                  finalize_in_kernel, inv_n):
    """Kernel: per-chunk sum of (o - t)^2 over a (rows, 128) slab."""
    n_groups = tr // group
    has_tail = grid_rows > rows_valid   # some block runs past the valid rows

    def kernel(o_ref, t_ref, loss_ref, acc_ref):
        c = pl.program_id(0)            # chunk (parallel; megacore on v7x)
        s = pl.program_id(1)            # step within chunk (reduction axis)

        @pl.when(s == 0)
        def _init():
            acc_ref[...] = jnp.zeros_like(acc_ref)

        block_row0 = (c * steps + s) * tr

        def _accumulate(masked):
            # Iota is hoisted out of the group loop (JAX does not CSE it).
            row_iota = (lax.broadcasted_iota(jnp.int32, (group, _LANES), 0)
                        if masked else None)

            def body(i, part):
                r0 = pl.multiple_of(i * group, group)
                o = o_ref[pl.ds(r0, group), :].astype(jnp.float32)
                t = t_ref[pl.ds(r0, group), :].astype(jnp.float32)
                d = o - t
                dd = d * d
                if masked:
                    # Rows at/after `rows_valid` hold OOB garbage for BOTH
                    # inputs; zero their squared difference explicitly.
                    limit = rows_valid - block_row0 - r0
                    dd = jnp.where(row_iota < limit, dd, 0.0)
                # (group,128) -> (group//8, 8, 128): axis-0 sum is pure VPU
                # elementwise adds into a single (8,128) vreg-group.
                return part + jnp.sum(
                    dd.reshape(group // _SUBLANES, _SUBLANES, _LANES), axis=0)

            zero = jnp.zeros((_SUBLANES, _LANES), jnp.float32)
            if n_groups == 1:
                return body(0, zero)
            return lax.fori_loop(0, n_groups, body, zero, unroll=2)

        if has_tail:
            is_tail = block_row0 + tr > rows_valid

            @pl.when(is_tail)
            def _tail():
                acc_ref[...] += _accumulate(True)

            @pl.when(jnp.logical_not(is_tail))
            def _body():
                acc_ref[...] += _accumulate(False)
        else:
            acc_ref[...] += _accumulate(False)

        @pl.when(s == steps - 1)
        def _finalize():
            # One cross-sublane/lane reduce per chunk (XLU), kept (1,1)-shaped
            # so the store is a plain vector write of the output block.
            total = jnp.sum(acc_ref[...], axis=0, keepdims=True)   # (1, 128)
            total = jnp.sum(total, axis=1, keepdims=True)          # (1, 1)
            if finalize_in_kernel:
                # Single chunk: emit the final RMSE directly (no XLA epilogue).
                total = jnp.sqrt(total * jnp.float32(inv_n))
            loss_ref[0] = total

    return kernel


def root_mse_loss(output, target, *, tile_rows=None, num_chunks=None):
    """RootLossWrapper(nn.MSELoss(), reduction='mean') forward. Returns f32 scalar."""
    assert output.shape == target.shape, "output/target shapes must match"
    n_elems = int(output.size)
    assert n_elems > 0

    dflt_tile, dflt_chunks = _device_defaults()
    if tile_rows is None:
        tile_rows = dflt_tile
    if num_chunks is None:
        num_chunks = dflt_chunks

    pack = _sublane_pack(output.dtype, target.dtype)
    group_max = max(_GROUP_MAX, pack)
    tile_rows = max(group_max, _round_up(int(tile_rows), group_max))

    o_flat = output.reshape(-1)
    t_flat = target.reshape(-1)

    # Rare fallback: flat length not a multiple of 128 lanes -> tiny (<128 elem)
    # zero pad so the lane-dense (rows, 128) view exists.  Zero-padding BOTH
    # tensors adds exactly 0 to sum((o-t)^2).  This is the only copying path.
    rem = n_elems % _LANES
    if rem:
        pad = _LANES - rem
        o_flat = jnp.pad(o_flat, (0, pad))
        t_flat = jnp.pad(t_flat, (0, pad))
        rows = (n_elems + pad) // _LANES
    else:
        rows = n_elems // _LANES

    def _plan(nc):
        steps = pl.cdiv(rows, nc * tile_rows)
        x = pl.cdiv(rows, nc * steps)
        group = min(group_max, _round_up(x, pack))
        tr = _round_up(x, group)          # tr % group == 0, tr <= tile_rows
        return steps, tr, group

    num_chunks = max(1, int(num_chunks))
    if num_chunks > 1 and rows < 4 * tile_rows:
        num_chunks = 1                    # don't split small streams
    steps, tr, group = _plan(num_chunks)
    # Every block must *start* inside the array (only trailing blocks may run
    # past the end).  The 1-chunk plan provably satisfies this; fall back if
    # the chunked plan does not.
    if (num_chunks * steps - 1) * tr >= rows:
        num_chunks = 1
        steps, tr, group = _plan(1)

    grid_rows = num_chunks * steps * tr
    finalize_in_kernel = (num_chunks == 1)
    inv_n = 1.0 / n_elems                 # Python double precision

    o2d = o_flat.reshape(rows, _LANES)
    t2d = t_flat.reshape(rows, _LANES)

    kernel = _build_kernel(steps=steps, tr=tr, group=group, rows_valid=rows,
                           grid_rows=grid_rows,
                           finalize_in_kernel=finalize_in_kernel, inv_n=inv_n)

    # 2 inputs x 2 pipeline buffers per block, plus headroom for the tiny
    # accumulator/output and Mosaic internal scratch.
    block_bytes = tr * _LANES * (o2d.dtype.itemsize + t2d.dtype.itemsize)
    vmem_limit = int(max(32 << 20, 2 * block_bytes + (8 << 20)))

    cost = pl.CostEstimate(
        flops=3 * n_elems,                       # sub, mul, add per element
        transcendentals=1,                       # the final sqrt
        bytes_accessed=n_elems * (output.dtype.itemsize
                                  + target.dtype.itemsize) + num_chunks * 4)

    in_map = lambda c, s: (c * steps + s, 0)

    chunk_out = pl.pallas_call(
        kernel,
        out_shape=jax.ShapeDtypeStruct((num_chunks, 1, 1), jnp.float32),
        grid_spec=pltpu.PrefetchScalarGridSpec(
            num_scalar_prefetch=0,
            grid=(num_chunks, steps),
            in_specs=[
                pl.BlockSpec((tr, _LANES), in_map),
                pl.BlockSpec((tr, _LANES), in_map),
            ],
            out_specs=pl.BlockSpec((1, 1, 1), lambda c, s: (c, 0, 0)),
            scratch_shapes=[pltpu.VMEM((_SUBLANES, _LANES), jnp.float32)],
        ),
        compiler_params=pltpu.CompilerParams(
            dimension_semantics=("parallel", "arbitrary"),
            vmem_limit_bytes=vmem_limit,
        ),
        cost_estimate=cost,
    )(o2d, t2d)

    if finalize_in_kernel:
        return chunk_out.reshape(())      # kernel already applied 1/N and sqrt
    # Tiny combine across chunk partial sums (v7x megacore path only).
    return jnp.sqrt(jnp.sum(chunk_out) * jnp.float32(inv_n))


if __name__ == "__main__":
    key = jax.random.PRNGKey(0)

    def _check(shape, k, tol=1e-5):
        k1, k2 = jax.random.split(k)
        o = jax.random.normal(k1, shape, dtype=jnp.float32)
        t = jax.random.normal(k2, shape, dtype=jnp.float32)
        got = jax.block_until_ready(root_mse_loss(o, t))
        ref = jnp.sqrt(jnp.mean((o - t) ** 2))
        assert jnp.allclose(got, ref, rtol=tol, atol=tol), (shape, got, ref)
        return got

    k0, k1, k2 = jax.random.split(key, 3)
    # Primary example: NCHW regression output/target (batch=2, channels=4, 16x16).
    _check((2, 4, 16, 16), k0)   # 2048 elems: exact (rows,128) fit, no mask
    # Extra correctness coverage of the new no-pad paths (cheap, small):
    _check((2, 4, 16, 20), k1)   # 2560 elems: ragged sublane tail -> in-kernel mask
    _check((3, 5, 7, 11), k2)    # 1155 elems: n % 128 != 0 -> tiny-pad fallback
    print("KERNEL_OK")
</pallas_src>

<mosaic_0001>
module attributes {stable_mosaic.version = 11 : i64} {
  func.func @kernel(%arg0: i32, %arg1: i32, %arg2: memref<16x128xf32, #tpu.memory_space<vmem>>, %arg3: memref<16x128xf32, #tpu.memory_space<vmem>>, %arg4: memref<1x1x1xf32, #tpu.memory_space<vmem>>, %arg5: memref<8x128xf32, #tpu.memory_space<vmem>>) attributes {dimension_semantics = [#tpu.dimension_semantics<parallel>, #tpu.dimension_semantics<arbitrary>], iteration_bounds = array<i64: 1, 1>, scalar_prefetch = 0 : i64, scratch_operands = 1 : i64, tpu.core_type = #tpu.core_type<tc>, window_params = [{transform_indices = @transform_0, window_bounds = array<i64: 16, 128>}, {transform_indices = @transform_1, window_bounds = array<i64: 16, 128>}, {transform_indices = @transform_2, window_bounds = array<i64: 1, 1, 1>}]} {
    %c0_i32 = arith.constant 0 : i32
    %0 = arith.cmpi eq, %arg1, %c0_i32 : i32
    %1 = arith.extui %0 : i1 to i32
    %c0_i32_0 = arith.constant 0 : i32
    %2 = arith.cmpi ne, %1, %c0_i32_0 : i32
    scf.if %2 {
      %cst_10 = arith.constant 0.000000e+00 : f32
      %20 = vector.broadcast %cst_10 : f32 to vector<8x128xf32>
      %c0_11 = arith.constant 0 : index
      %c0_12 = arith.constant 0 : index
      %21 = vector.load %arg5[%c0_11, %c0_12] : memref<8x128xf32, #tpu.memory_space<vmem>>, vector<8x128xf32>
      tpu.vector_store %arg5[%c0_11, %c0_12], %20 {strides = array<i32>} : memref<8x128xf32, #tpu.memory_space<vmem>>, vector<8x128xf32>,
    } else {
    }
    %c0 = arith.constant 0 : index
    %c0_1 = arith.constant 0 : index
    %3 = vector.load %arg5[%c0, %c0_1] : memref<8x128xf32, #tpu.memory_space<vmem>>, vector<8x128xf32>
    %cst = arith.constant 0.000000e+00 : f32
    %4 = vector.broadcast %cst : f32 to vector<8x128xf32>
    %c0_i32_2 = arith.constant 0 : i32
    %5 = tpu.assume_multiple %c0_i32_2, 16 : i32
    %6 = arith.index_cast %5 : i32 to index
    %c0_3 = arith.constant 0 : index
    %7 = vector.load %arg2[%6, %c0_3] : memref<16x128xf32, #tpu.memory_space<vmem>>, vector<16x128xf32>
    %8 = arith.index_cast %5 : i32 to index
    %c0_4 = arith.constant 0 : index
    %9 = vector.load %arg3[%8, %c0_4] : memref<16x128xf32, #tpu.memory_space<vmem>>, vector<16x128xf32>
    %10 = arith.subf %7, %9 : vector<16x128xf32>
    %11 = arith.mulf %10, %10 : vector<16x128xf32>
    %12 = vector.shape_cast %11 : vector<16x128xf32> to vector<2x8x128xf32>
    %cst_5 = arith.constant dense<0.000000e+00> : vector<8x128xf32>
    %13 = vector.multi_reduction <add>, %12, %cst_5 [0] : vector<2x8x128xf32> to vector<8x128xf32>
    %14 = arith.addf %4, %13 : vector<8x128xf32>
    %15 = arith.addf %3, %14 : vector<8x128xf32>
    %c0_6 = arith.constant 0 : index
    %c0_7 = arith.constant 0 : index
    %16 = vector.load %arg5[%c0_6, %c0_7] : memref<8x128xf32, #tpu.memory_space<vmem>>, vector<8x128xf32>
    tpu.vector_store %arg5[%c0_6, %c0_7], %15 {strides = array<i32>} : memref<8x128xf32, #tpu.memory_space<vmem>>, vector<8x128xf32>,
    %c0_i32_8 = arith.constant 0 : i32
    %17 = arith.cmpi eq, %arg1, %c0_i32_8 : i32
    %18 = arith.extui %17 : i1 to i32
    %c0_i32_9 = arith.constant 0 : i32
    %19 = arith.cmpi ne, %18, %c0_i32_9 : i32
    scf.if %19 {
      %c0_10 = arith.constant 0 : index
      %c0_11 = arith.constant 0 : index
      %20 = vector.load %arg5[%c0_10, %c0_11] : memref<8x128xf32, #tpu.memory_space<vmem>>, vector<8x128xf32>
      %cst_12 = arith.constant dense<0.000000e+00> : vector<128xf32>
      %21 = vector.multi_reduction <add>, %20, %cst_12 [0] : vector<8x128xf32> to vector<128xf32>
      %22 = vector.shape_cast %21 : vector<128xf32> to vector<1x128xf32>
      %cst_13 = arith.constant dense<0.000000e+00> : vector<1xf32>
      %23 = vector.multi_reduction <add>, %22, %cst_13 [1] : vector<1x128xf32> to vector<1xf32>
      %24 = vector.shape_cast %23 : vector<1xf32> to vector<1x1xf32>
      %cst_14 = arith.constant 4.8828125E-4 : f32
      %25 = vector.broadcast %cst_14 : f32 to vector<1x1xf32>
      %26 = arith.mulf %24, %25 : vector<1x1xf32>
      %27 = math.sqrt %26 : vector<1x1xf32>
      %c0_15 = arith.constant 0 : index
      %c0_16 = arith.constant 0 : index
      %c0_17 = arith.constant 0 : index
      %28 = vector.load %arg4[%c0_15, %c0_16, %c0_17] : memref<1x1x1xf32, #tpu.memory_space<vmem>>, vector<1x1x1xf32>
      %29 = vector.shape_cast %28 : vector<1x1x1xf32> to vector<1x1xf32>
      %30 = vector.shape_cast %27 : vector<1x1xf32> to vector<1x1x1xf32>
      tpu.vector_store %arg4[%c0_15, %c0_16, %c0_17], %30 {strides = array<i32>} : memref<1x1x1xf32, #tpu.memory_space<vmem>>, vector<1x1x1xf32>,
    } else {
    }
    return
  }
  func.func @transform_0(%arg0: i32, %arg1: i32) -> (i32, i32) {
    %c1_i32 = arith.constant 1 : i32
    %0 = arith.muli %arg0, %c1_i32 : i32
    %1 = arith.addi %0, %arg1 : i32
    %c0_i32 = arith.constant 0 : i32
    %c0_i32_0 = arith.constant 0 : i32
    return %1, %c0_i32 : i32, i32
  }
  func.func @transform_1(%arg0: i32, %arg1: i32) -> (i32, i32) {
    %c1_i32 = arith.constant 1 : i32
    %0 = arith.muli %arg0, %c1_i32 : i32
    %1 = arith.addi %0, %arg1 : i32
    %c0_i32 = arith.constant 0 : i32
    %c0_i32_0 = arith.constant 0 : i32
    return %1, %c0_i32 : i32, i32
  }
  func.func @transform_2(%arg0: i32, %arg1: i32) -> (i32, i32, i32) {
    %c0_i32 = arith.constant 0 : i32
    %c0_i32_0 = arith.constant 0 : i32
    %c0_i32_1 = arith.constant 0 : i32
    return %arg0, %c0_i32, %c0_i32_0 : i32, i32, i32
  }
}

</mosaic_0001>

<llo_original>
// kernel: tpu_custom_call.1
$region0: #{tpu_custom_call.1}
  #allocation0 [shape = 'u32[]', space=smem, size = 0x4, offset = 0x4, fixed_abs, tag = 'smem constant byte address 0x4 - core index']
  #allocation1 [shape = 'u32[72,128]{1,0:T(1,128)}', space=vmem, size = 0x9000, scoped, tag = 'internal scratch']
  #allocation2 [shape = 'f32[8,128]{1,0:T(8,128)}', space=vmem, size = 0x1000, scoped, tag = 'scratch operand']
  %s0 = inlined_call_operand.hbm [shape: f32[16,128], index: 0, kind: input, shape index: {}]
  %s1 = inlined_call_operand.hbm [shape: f32[16,128], index: 1, kind: input, shape index: {}]
  %s2 = inlined_call_operand.hbm [shape: f32[1,1,1], index: 2, kind: output, shape index: {}]
  %s3 = sld [smem:[#allocation0]]
  $region34: #{tpu_custom_call.1} parent=0
    _
  %s5 = ssub.s32 1, %s3
  %s6 = scalar_select 0, %s5, %s3
  $region1: #{tpu_custom_call.1} parent=0
    #allocation3 [shape = 'u8[8192]{0}', space=vmem, size = 0x2000, scoped, tag = 'input window, operand 0, single buffered']
    #allocation4 [shape = 's32[1]{0}', space=sflag, size = 0x4, scoped, tag = 'scoped memory for tpu_custom_call.1']
    #allocation5 [shape = 's32[1]{0}', space=sflag, size = 0x4, scoped, tag = 'scoped memory for tpu_custom_call.1']
    #allocation6 [shape = 'u8[8192]{0}', space=vmem, size = 0x2000, scoped, tag = 'input window, operand 1, single buffered']
    #allocation7 [shape = 's32[1]{0}', space=sflag, size = 0x4, scoped, tag = 'scoped memory for tpu_custom_call.1']
    #allocation8 [shape = 'u8[512]{0}', space=vmem, size = 0x400, scoped, tag = 'output window, operand 0, single buffered']
    %7 = vsyncpa [#allocation4], 0
    %8 = vsyncpa [#allocation7], 0
    %9 = vsyncpa [#allocation5], 0
    // Predicated region
    $region2: #{tpu_custom_call.1} parent=1 // pred_check
      _
    $region3: #{tpu_custom_call.1} parent=1 // pred_check_branch
      %11 = sbr.rel (0) target = $region5
    $region4: #{tpu_custom_call.1} parent=1 // pred_region
      %s12 = sadd.s32 0, 0
      %s13 = smul.u32 2, %s12
      %15 = vsyncadd [#allocation4], 0
      %s16 = smul.addr %s13, 8
      %s17 = scalar_lea.hbm %s0, %s16
      %s18 = sshll.u32 %s17, 4
      %s19 = int_to_ptr.hbm [resolvable:$true] %s18
      %s20 = sshll.u32 [#allocation3], 4
      %s21 = int_to_ptr.vmem [resolvable:$true] %s20
      %26 = dma.hbm_to_vmem [thread:$0]  %s19, 256, %s21, [#allocation4], 128, 128, 8
    $region5: #{tpu_custom_call.1} parent=1 // pred_fallthru
      _
    // Predicated region
    $region6: #{tpu_custom_call.1} parent=1 // pred_check
      _
    $region7: #{tpu_custom_call.1} parent=1 // pred_check_branch
      %28 = sbr.rel (0) target = $region9
    $region8: #{tpu_custom_call.1} parent=1 // pred_region
      %s29 = sadd.s32 0, 0
      %s30 = smul.u32 2, %s29
      %32 = vsyncadd [#allocation7], 0
      %s33 = smul.addr %s30, 8
      %s34 = scalar_lea.hbm %s1, %s33
      %s35 = sshll.u32 %s34, 4
      %s36 = int_to_ptr.hbm [resolvable:$true] %s35
      %s37 = sshll.u32 [#allocation6], 4
      %s38 = int_to_ptr.vmem [resolvable:$true] %s37
      %43 = dma.hbm_to_vmem [thread:$0]  %s36, 256, %s38, [#allocation7], 128, 128, 8
    $region9: #{tpu_custom_call.1} parent=1 // pred_fallthru
      _
    // Predicated region
    $region10: #{tpu_custom_call.1} parent=1 // pred_check
      _
    $region11: #{tpu_custom_call.1} parent=1 // pred_check_branch
      %45 = sbr.rel (0) target = $region13
    $region12: #{tpu_custom_call.1} parent=1 // pred_region
      %47 = dma.done [#allocation4], 256
    $region13: #{tpu_custom_call.1} parent=1 // pred_fallthru
      _
    // Predicated region
    $region14: #{tpu_custom_call.1} parent=1 // pred_check
      _
    $region15: #{tpu_custom_call.1} parent=1 // pred_check_branch
      %49 = sbr.rel (0) target = $region17
    $region16: #{tpu_custom_call.1} parent=1 // pred_region
      %51 = dma.done [#allocation7], 256
    $region17: #{tpu_custom_call.1} parent=1 // pred_fallthru
      _
    %s52 = sadd.s32 0, 0
    %s53 = smul.u32 2, %s52
    %s54 = sadd.s32 0, 0
    %s55 = smul.u32 2, %s54
    %p56 = scmp.eq.s32.totalorder 0, 0
    // Predicated region
    $region18: #{tpu_custom_call.1} parent=1 // pred_check
      %p57 = pneg %p56
    $region19: #{tpu_custom_call.1} parent=1 // pred_check_branch
      %59 = sbr.rel (%p57) target = $region21
    $region20: #{tpu_custom_call.1} parent=1 // pred_region
      %60 = vst [vmem:[#allocation2] sm:$0xff] 0.0
    $region21: #{tpu_custom_call.1} parent=1 // pred_fallthru
      _
    %v61 = vld [vmem:[#allocation2] sm:$0xff]
    %v62 = vld [vmem:[#allocation3] sm:$0xff]
    %v63 = vld [vmem:[#allocation3 + $0x8] sm:$0xff]
    %v64 = vld [vmem:[#allocation6] sm:$0xff]
    %v65 = vld [vmem:[#allocation6 + $0x8] sm:$0xff]
    %v66 = vsub.f32 %v62, %v64
    %v67 = vsub.f32 %v63, %v65
    %v68 = vmul.f32 %v66, %v66
    %v69 = vmul.f32 %v67, %v67
    %v70 = vadd.f32 %v68, %v69
    %v71 = vadd.f32 %v70, 0.0
    %v72 = vadd.f32 %v61, %v71
    %73 = vst [vmem:[#allocation2] sm:$0xff] %v72
    // Predicated region
    $region22: #{tpu_custom_call.1} parent=1 // pred_check
      %p74 = pneg %p56
    $region23: #{tpu_custom_call.1} parent=1 // pred_check_branch
      %76 = sbr.rel (%p74) target = $region25
    $region24: #{tpu_custom_call.1} parent=1 // pred_region
      %v77 = vld [vmem:[#allocation2] sm:$0xff]
      %v78 = vrot.slane %v77, 4
      %v79 = vadd.f32 %v77, %v78
      %v80 = vrot.slane %v79, 2
      %v81 = vadd.f32 %v79, %v80
      %v82 = vrot.slane %v81, 1
      %v83 = vadd.f32 %v81, %v82
      %84 = vadd.xlane.f32.xlu0 %v83
      %v85 = vpop.xlane.xlu0 %84
      %v86 = vmul.f32 %v85, 0.00048828125
      %v87 = vrsqrt.pop %v86
      %v88 = vmul.f32 %v87, %v86
      %v89 = vmul.f32 %v88, %v87
      %v90 = vmul.f32 0.5, %v89
      %v91 = vsub.f32 1.5, %v90
      %v92 = vmul.f32 %v87, %v91
      %v93 = vmul.f32 %v86, %v92
      %vm94 = vcmp.eq.f32.partialorder %v86, inf
      %v95 = vsel %vm94, %v86, %v93
      %vm96 = vcmp.eq.f32.partialorder %v86, 0.0
      %v97 = vand.u32 %v86, 2147483648
      %v98 = vsel %vm96, %v97, %v95
      %vm99 = vcmask 0
      %100 = vst.msk [vmem:[#allocation8] sm:$0x1] %vm99, %v98
    $region25: #{tpu_custom_call.1} parent=1 // pred_fallthru
      _
    // Predicated region
    $region26: #{tpu_custom_call.1} parent=1 // pred_check
      _
    $region27: #{tpu_custom_call.1} parent=1 // pred_check_branch
      %102 = sbr.rel (0) target = $region29
    $region28: #{tpu_custom_call.1} parent=1 // pred_region
      %104 = vsyncadd [#allocation5], 0
      %s106 = sshll.u32 [#allocation8], 4
      %s107 = int_to_ptr.vmem [resolvable:$true] %s106
      %s108 = sshll.u32 %s2, 4
      %s109 = int_to_ptr.hbm [resolvable:$true] %s108
      %111 = dma.vmem_to_hbm [thread:$0]  %s107, 16, %s109, [#allocation5]
    $region29: #{tpu_custom_call.1} parent=1 // pred_fallthru
      _
    // Predicated region
    $region30: #{tpu_custom_call.1} parent=1 // pred_check
      _
    $region31: #{tpu_custom_call.1} parent=1 // pred_check_branch
      %113 = sbr.rel (0) target = $region33
    $region32: #{tpu_custom_call.1} parent=1 // pred_region
      %115 = dma.done [#allocation5], 16
    $region33: #{tpu_custom_call.1} parent=1 // pred_fallthru
      _
    %116 = vsyncpa [#allocation4], 1
    %117 = vsyncpa [#allocation7], 1
    %118 = vsyncpa [#allocation5], 1

</llo_original>
